<compile_context>
chip_gen: v7x
topology: tpu7x:2x2x1
jax: 0.10.0
libtpu: 0.0.40
codegen_flags: <defaults>
</compile_context>

<pallas_src>
import functools

import jax
import jax.numpy as jnp
from jax.experimental import pallas as pl
from jax.experimental.pallas import tpu as pltpu

EPS = 1e-5
LANE = 128                     # lane width: channel / K padding granularity
DEF_TILE_M = 256               # rows-of-patches tile
DEF_TILE_K = 128               # K-reduction tile (MXU-aligned on v5e/v6e/v7x)
VMEM_LIMIT = 32 * 1024 * 1024  # explicit scoped-VMEM budget with headroom


def _round_up(x, m):
    return (x + m - 1) // m * m


# ----------------------------------------------------------------------------
# Kernel 1: tiled conv-as-matmul + one-pass BN partial stats (sum, sum-of-sq)
# ----------------------------------------------------------------------------
def _conv_stats_kernel(p_ref, w_ref, y_ref, st_ref, acc_ref):
    k = pl.program_id(1)

    @pl.when(k == 0)
    def _():
        acc_ref[...] = jnp.zeros_like(acc_ref)

    acc_ref[...] += jnp.dot(p_ref[...], w_ref[...],
                            preferred_element_type=jnp.float32)

    @pl.when(k == pl.num_programs(1) - 1)
    def _():
        y = acc_ref[...]
        y_ref[...] = y.astype(y_ref.dtype)
        s1 = jnp.sum(y, axis=0, keepdims=True)       # (1, C)  per-tile sum
        s2 = jnp.sum(y * y, axis=0, keepdims=True)   # (1, C)  per-tile sumsq
        st_ref[...] = jnp.concatenate([s1, s2], axis=0).reshape(
            1, 2, y.shape[-1])


def conv_matmul_stats(patches, w2d, c_pad, tile_m, m_pad, tile_k=DEF_TILE_K):
    """patches (M,K), w2d (K,Cout) -> y (m_pad,c_pad) f32 + per-tile BN partials."""
    m, kk = patches.shape
    cout = w2d.shape[1]
    k_pad = _round_up(kk, tile_k)

    # bf16 operands for the MXU; zero-padding keeps the math exact.
    p = jnp.pad(patches.astype(jnp.bfloat16), ((0, m_pad - m), (0, k_pad - kk)))
    w = jnp.pad(w2d.astype(jnp.bfloat16), ((0, k_pad - kk), (0, c_pad - cout)))

    num_m, num_k = m_pad // tile_m, k_pad // tile_k
    y, stats = pl.pallas_call(
        _conv_stats_kernel,
        out_shape=[jax.ShapeDtypeStruct((m_pad, c_pad), jnp.float32),
                   jax.ShapeDtypeStruct((num_m, 2, c_pad), jnp.float32)],
        grid=(num_m, num_k),
        in_specs=[pl.BlockSpec((tile_m, tile_k), lambda i, k: (i, k)),
                  pl.BlockSpec((tile_k, c_pad), lambda i, k: (k, 0))],
        out_specs=[pl.BlockSpec((tile_m, c_pad), lambda i, k: (i, 0)),
                   pl.BlockSpec((1, 2, c_pad), lambda i, k: (i, 0, 0))],
        scratch_shapes=[pltpu.VMEM((tile_m, c_pad), jnp.float32)],
        compiler_params=pltpu.CompilerParams(
            dimension_semantics=("parallel", "arbitrary"),
            vmem_limit_bytes=VMEM_LIMIT),
    )(p, w)
    return y, stats


def bn_scale_shift(stats, count, gamma, beta, c_pad):
    """Combine per-tile partials -> per-channel BN scale/shift (tiny JAX glue)."""
    s = jnp.sum(stats[:, 0, :], axis=0)
    sq = jnp.sum(stats[:, 1, :], axis=0)
    mean = s / count
    var = jnp.maximum(sq / count - mean * mean, 0.0)   # biased batch variance
    g = jnp.pad(gamma.astype(jnp.float32), (0, c_pad - gamma.shape[0]),
                constant_values=1.0)
    b = jnp.pad(beta.astype(jnp.float32), (0, c_pad - beta.shape[0]))
    scale = g * jax.lax.rsqrt(var + EPS)
    shift = b - mean * scale
    return scale.reshape(1, c_pad), shift.reshape(1, c_pad)


# ----------------------------------------------------------------------------
# Kernel 2: tiled BN apply (scale/shift) [+ residual (optionally its own BN)] [+ ReLU]
# ----------------------------------------------------------------------------
def _bn_apply_kernel(*refs, relu, res_mode):
    if res_mode == 0:
        y_ref, sc_ref, sh_ref, o_ref = refs
        res = None
    elif res_mode == 1:
        y_ref, sc_ref, sh_ref, r_ref, o_ref = refs
        res = r_ref[...].astype(jnp.float32)
    else:  # res_mode == 2: residual is a pre-BN conv output with its own scale/shift
        y_ref, sc_ref, sh_ref, r_ref, rsc_ref, rsh_ref, o_ref = refs
        res = r_ref[...].astype(jnp.float32) * rsc_ref[...] + rsh_ref[...]

    out = y_ref[...].astype(jnp.float32) * sc_ref[...] + sh_ref[...]
    if res is not None:
        out = out + res
    if relu:
        out = jnp.maximum(out, 0.0)
    o_ref[...] = out.astype(o_ref.dtype)


def bn_apply(y, scale, shift, tile_m, *, residual=None, res_scale=None,
             res_shift=None, relu=False, out_dtype=jnp.float32):
    m_pad, c_pad = y.shape
    num_m = m_pad // tile_m

    inputs = [y, scale, shift]
    in_specs = [pl.BlockSpec((tile_m, c_pad), lambda i: (i, 0)),
                pl.BlockSpec((1, c_pad), lambda i: (0, 0)),
                pl.BlockSpec((1, c_pad), lambda i: (0, 0))]
    res_mode = 0
    if residual is not None:
        inputs.append(residual)
        in_specs.append(pl.BlockSpec((tile_m, c_pad), lambda i: (i, 0)))
        if res_scale is not None:
            res_mode = 2
            inputs += [res_scale, res_shift]
            in_specs += [pl.BlockSpec((1, c_pad), lambda i: (0, 0)),
                         pl.BlockSpec((1, c_pad), lambda i: (0, 0))]
        else:
            res_mode = 1

    kernel = functools.partial(_bn_apply_kernel, relu=relu, res_mode=res_mode)
    return pl.pallas_call(
        kernel,
        out_shape=jax.ShapeDtypeStruct((m_pad, c_pad), out_dtype),
        grid=(num_m,),
        in_specs=in_specs,
        out_specs=pl.BlockSpec((tile_m, c_pad), lambda i: (i, 0)),
        compiler_params=pltpu.CompilerParams(
            dimension_semantics=("parallel",),
            vmem_limit_bytes=VMEM_LIMIT),
    )(*inputs)


# ----------------------------------------------------------------------------
# JAX glue: im2col + weight layout conversion
# ----------------------------------------------------------------------------
def im2col(x_nhwc, ksize, stride, pad):
    """x: (N,H,W,C) -> patches (N*Ho*Wo, ksize*ksize*C), ordered [kh, kw, cin]."""
    n, h, w, c = x_nhwc.shape
    xp = jnp.pad(x_nhwc, ((0, 0), (pad, pad), (pad, pad), (0, 0)))
    ho = (h + 2 * pad - ksize) // stride + 1
    wo = (w + 2 * pad - ksize) // stride + 1
    cols = []
    for kh in range(ksize):
        for kw in range(ksize):
            cols.append(xp[:, kh:kh + ho * stride:stride,
                           kw:kw + wo * stride:stride, :])
    patches = jnp.concatenate(cols, axis=-1)
    return patches.reshape(n * ho * wo, ksize * ksize * c), ho, wo


def w_oihw_to_2d(w_oihw):
    """PyTorch (Cout, Cin, KH, KW) -> (KH*KW*Cin, Cout), matching im2col order."""
    co, ci, kh, kw = w_oihw.shape
    return jnp.transpose(w_oihw, (2, 3, 1, 0)).reshape(kh * kw * ci, co)


# ----------------------------------------------------------------------------
# ResidualBlock forward (Pallas path)
# ----------------------------------------------------------------------------
def residual_block_forward(x_nchw, params, stride):
    x = jnp.transpose(x_nchw, (0, 2, 3, 1)).astype(jnp.float32)   # NCHW -> NHWC
    n, h, w, cin = x.shape
    cout = params["w1"].shape[0]

    ho = (h + 2 - 3) // stride + 1
    wo = (w + 2 - 3) // stride + 1
    m = n * ho * wo                      # same row count for conv1/shortcut/conv2
    c_pad = _round_up(cout, LANE)        # lane-dense channel dim
    tile_m = min(DEF_TILE_M, _round_up(m, 8))
    m_pad = _round_up(m, tile_m)

    x_bf16 = x.astype(jnp.bfloat16)

    # ---- conv1 (3x3, stride, pad=1) + bn1 + relu
    p1, _, _ = im2col(x_bf16, 3, stride, 1)
    y1, st1 = conv_matmul_stats(p1, w_oihw_to_2d(params["w1"]), c_pad, tile_m, m_pad)
    sc1, sh1 = bn_scale_shift(st1, m, params["g1"], params["b1"], c_pad)
    h1 = bn_apply(y1, sc1, sh1, tile_m, relu=True, out_dtype=jnp.bfloat16)
    h1_nhwc = h1[:m, :cout].reshape(n, ho, wo, cout)

    # ---- shortcut branch (projection BN is folded into the conv2 apply kernel)
    if stride != 1 or cin != cout:
        ps, _, _ = im2col(x_bf16, 1, stride, 0)
        y_s, st_s = conv_matmul_stats(ps, w_oihw_to_2d(params["ws"]), c_pad,
                                      tile_m, m_pad)
        res_sc, res_sh = bn_scale_shift(st_s, m, params["gs"], params["bs"], c_pad)
        res = y_s
    else:
        # identity shortcut: valid only for stride==1 and cin==cout (guarded above)
        res = jnp.pad(x.reshape(m, cin), ((0, m_pad - m), (0, c_pad - cin)))
        res_sc = res_sh = None

    # ---- conv2 (3x3, stride=1, pad=1) + bn2 + residual add + relu (one kernel)
    p2, _, _ = im2col(h1_nhwc, 3, 1, 1)
    y2, st2 = conv_matmul_stats(p2, w_oihw_to_2d(params["w2"]), c_pad, tile_m, m_pad)
    sc2, sh2 = bn_scale_shift(st2, m, params["g2"], params["b2"], c_pad)
    out = bn_apply(y2, sc2, sh2, tile_m, residual=res, res_scale=res_sc,
                   res_shift=res_sh, relu=True, out_dtype=jnp.float32)

    out = out[:m, :cout].reshape(n, ho, wo, cout)
    return jnp.transpose(out, (0, 3, 1, 2))   # NHWC -> NCHW


# ----------------------------------------------------------------------------
# Pure-JAX reference (for correctness check)
# ----------------------------------------------------------------------------
def _ref_conv(x_nhwc, w_oihw, stride, pad):
    return jax.lax.conv_general_dilated(
        x_nhwc, jnp.transpose(w_oihw, (2, 3, 1, 0)), (stride, stride),
        [(pad, pad), (pad, pad)], dimension_numbers=("NHWC", "HWIO", "NHWC"))


def _ref_bn(y, g, b):
    mean = y.mean(axis=(0, 1, 2), keepdims=True)
    var = jnp.square(y - mean).mean(axis=(0, 1, 2), keepdims=True)
    return (y - mean) * jax.lax.rsqrt(var + EPS) * g + b


def residual_block_reference(x_nchw, params, stride):
    x = jnp.transpose(x_nchw, (0, 2, 3, 1))
    cin = x.shape[-1]
    cout = params["w1"].shape[0]
    out = jax.nn.relu(_ref_bn(_ref_conv(x, params["w1"], stride, 1),
                              params["g1"], params["b1"]))
    out = _ref_bn(_ref_conv(out, params["w2"], 1, 1), params["g2"], params["b2"])
    if stride != 1 or cin != cout:
        sc = _ref_bn(_ref_conv(x, params["ws"], stride, 0), params["gs"], params["bs"])
    else:
        sc = x
    out = jax.nn.relu(out + sc)
    return jnp.transpose(out, (0, 3, 1, 2))


# ----------------------------------------------------------------------------
def make_params(key, in_channels, out_channels, stride):
    ks = jax.random.split(key, 8)
    p = {
        "w1": 0.1 * jax.random.normal(ks[0], (out_channels, in_channels, 3, 3), jnp.float32),
        "g1": 1.0 + 0.1 * jax.random.normal(ks[1], (out_channels,), jnp.float32),
        "b1": 0.1 * jax.random.normal(ks[2], (out_channels,), jnp.float32),
        "w2": 0.1 * jax.random.normal(ks[3], (out_channels, out_channels, 3, 3), jnp.float32),
        "g2": 1.0 + 0.1 * jax.random.normal(ks[4], (out_channels,), jnp.float32),
        "b2": 0.1 * jax.random.normal(ks[5], (out_channels,), jnp.float32),
    }
    if stride != 1 or in_channels != out_channels:
        p["ws"] = 0.1 * jax.random.normal(ks[6], (out_channels, in_channels, 1, 1), jnp.float32)
        p["gs"] = jnp.ones((out_channels,), jnp.float32)
        p["bs"] = 0.1 * jax.random.normal(ks[7], (out_channels,), jnp.float32)
    return p


if __name__ == "__main__":
    key = jax.random.PRNGKey(0)
    kx, kp, kx2, kp2 = jax.random.split(key, 4)

    # Case 1: projection shortcut (stride=2, Cin != Cout)
    N, CIN, COUT, H, W, STRIDE = 2, 4, 8, 16, 16, 2
    x = jax.random.normal(kx, (N, CIN, H, W), jnp.float32)   # PyTorch-style NCHW
    params = make_params(kp, CIN, COUT, STRIDE)
    out = jax.block_until_ready(residual_block_forward(x, params, STRIDE))
    ref = jax.block_until_ready(residual_block_reference(x, params, STRIDE))
    assert out.shape == (N, COUT, H // STRIDE, W // STRIDE), out.shape
    assert jnp.allclose(out, ref, atol=3e-2, rtol=3e-2), \
        float(jnp.max(jnp.abs(out - ref)))

    # Case 2: identity shortcut (stride=1, Cin == Cout); exercises multi-tile M
    N2, C2, H2, W2 = 2, 8, 16, 16
    x2 = jax.random.normal(kx2, (N2, C2, H2, W2), jnp.float32)
    params2 = make_params(kp2, C2, C2, 1)
    out2 = jax.block_until_ready(residual_block_forward(x2, params2, 1))
    ref2 = jax.block_until_ready(residual_block_reference(x2, params2, 1))
    assert out2.shape == (N2, C2, H2, W2), out2.shape
    assert jnp.allclose(out2, ref2, atol=3e-2, rtol=3e-2), \
        float(jnp.max(jnp.abs(out2 - ref2)))

    print("KERNEL_OK")
</pallas_src>

<mosaic_0001>
module attributes {stable_mosaic.version = 11 : i64} {
  func.func @_conv_stats_kernel(%arg0: i32, %arg1: i32, %arg2: memref<128x128xbf16, #tpu.memory_space<vmem>>, %arg3: memref<128x128xbf16, #tpu.memory_space<vmem>>, %arg4: memref<128x128xf32, #tpu.memory_space<vmem>>, %arg5: memref<1x2x128xf32, #tpu.memory_space<vmem>>, %arg6: memref<128x128xf32, #tpu.memory_space<vmem>>) attributes {dimension_semantics = [#tpu.dimension_semantics<parallel>, #tpu.dimension_semantics<arbitrary>], iteration_bounds = array<i64: 1, 1>, scalar_prefetch = 0 : i64, scratch_operands = 1 : i64, tpu.core_type = #tpu.core_type<tc>, window_params = [{transform_indices = @transform_0, window_bounds = array<i64: 128, 128>}, {transform_indices = @transform_1, window_bounds = array<i64: 128, 128>}, {transform_indices = @transform_2, window_bounds = array<i64: 128, 128>}, {transform_indices = @transform_3, window_bounds = array<i64: 1, 2, 128>}]} {
    %c0_i32 = arith.constant 0 : i32
    %0 = arith.cmpi eq, %arg1, %c0_i32 : i32
    %1 = arith.extui %0 : i1 to i32
    %c0_i32_0 = arith.constant 0 : i32
    %2 = arith.cmpi ne, %1, %c0_i32_0 : i32
    scf.if %2 {
      %cst_10 = arith.constant 0.000000e+00 : f32
      %12 = vector.broadcast %cst_10 : f32 to vector<128x128xf32>
      %c0_11 = arith.constant 0 : index
      %c0_12 = arith.constant 0 : index
      %13 = vector.load %arg6[%c0_11, %c0_12] : memref<128x128xf32, #tpu.memory_space<vmem>>, vector<128x128xf32>
      tpu.vector_store %arg6[%c0_11, %c0_12], %12 {strides = array<i32>} : memref<128x128xf32, #tpu.memory_space<vmem>>, vector<128x128xf32>,
    } else {
    }
    %c0 = arith.constant 0 : index
    %c0_1 = arith.constant 0 : index
    %3 = vector.load %arg6[%c0, %c0_1] : memref<128x128xf32, #tpu.memory_space<vmem>>, vector<128x128xf32>
    %c0_2 = arith.constant 0 : index
    %c0_3 = arith.constant 0 : index
    %4 = vector.load %arg2[%c0_2, %c0_3] : memref<128x128xbf16, #tpu.memory_space<vmem>>, vector<128x128xbf16>
    %c0_4 = arith.constant 0 : index
    %c0_5 = arith.constant 0 : index
    %5 = vector.load %arg3[%c0_4, %c0_5] : memref<128x128xbf16, #tpu.memory_space<vmem>>, vector<128x128xbf16>
    %cst = arith.constant dense<0.000000e+00> : vector<128x128xf32>
    %6 = tpu.matmul %4, %5, %cst {dimension_numbers = #tpu.dot_dimension_numbers<[1], [0], [0], [1], [0, 0, 1, 1], [], []>} : vector<128x128xbf16>, vector<128x128xbf16>, vector<128x128xf32> -> vector<128x128xf32>
    %7 = arith.addf %3, %6 : vector<128x128xf32>
    %c0_6 = arith.constant 0 : index
    %c0_7 = arith.constant 0 : index
    %8 = vector.load %arg6[%c0_6, %c0_7] : memref<128x128xf32, #tpu.memory_space<vmem>>, vector<128x128xf32>
    tpu.vector_store %arg6[%c0_6, %c0_7], %7 {strides = array<i32>} : memref<128x128xf32, #tpu.memory_space<vmem>>, vector<128x128xf32>,
    %c0_i32_8 = arith.constant 0 : i32
    %9 = arith.cmpi eq, %arg1, %c0_i32_8 : i32
    %10 = arith.extui %9 : i1 to i32
    %c0_i32_9 = arith.constant 0 : i32
    %11 = arith.cmpi ne, %10, %c0_i32_9 : i32
    scf.if %11 {
      %c0_10 = arith.constant 0 : index
      %c0_11 = arith.constant 0 : index
      %12 = vector.load %arg6[%c0_10, %c0_11] : memref<128x128xf32, #tpu.memory_space<vmem>>, vector<128x128xf32>
      %c0_12 = arith.constant 0 : index
      %c0_13 = arith.constant 0 : index
      %13 = vector.load %arg4[%c0_12, %c0_13] : memref<128x128xf32, #tpu.memory_space<vmem>>, vector<128x128xf32>
      tpu.vector_store %arg4[%c0_12, %c0_13], %12 {strides = array<i32>} : memref<128x128xf32, #tpu.memory_space<vmem>>, vector<128x128xf32>,
      %cst_14 = arith.constant dense<0.000000e+00> : vector<128xf32>
      %14 = vector.multi_reduction <add>, %12, %cst_14 [0] : vector<128x128xf32> to vector<128xf32>
      %15 = vector.shape_cast %14 : vector<128xf32> to vector<1x128xf32>
      %16 = arith.mulf %12, %12 : vector<128x128xf32>
      %cst_15 = arith.constant dense<0.000000e+00> : vector<128xf32>
      %17 = vector.multi_reduction <add>, %16, %cst_15 [0] : vector<128x128xf32> to vector<128xf32>
      %18 = vector.shape_cast %17 : vector<128xf32> to vector<1x128xf32>
      %19 = tpu.concatenate %15, %18 in 0 : vector<1x128xf32>, vector<1x128xf32> -> vector<2x128xf32>
      %20 = vector.shape_cast %19 : vector<2x128xf32> to vector<1x2x128xf32>
      %c0_16 = arith.constant 0 : index
      %c0_17 = arith.constant 0 : index
      %c0_18 = arith.constant 0 : index
      %21 = vector.load %arg5[%c0_16, %c0_17, %c0_18] : memref<1x2x128xf32, #tpu.memory_space<vmem>>, vector<1x2x128xf32>
      tpu.vector_store %arg5[%c0_16, %c0_17, %c0_18], %20 {strides = array<i32>} : memref<1x2x128xf32, #tpu.memory_space<vmem>>, vector<1x2x128xf32>,
    } else {
    }
    return
  }
  func.func @transform_0(%arg0: i32, %arg1: i32) -> (i32, i32) {
    %c0_i32 = arith.constant 0 : i32
    return %arg0, %arg1 : i32, i32
  }
  func.func @transform_1(%arg0: i32, %arg1: i32) -> (i32, i32) {
    %c0_i32 = arith.constant 0 : i32
    %c0_i32_0 = arith.constant 0 : i32
    return %arg1, %c0_i32 : i32, i32
  }
  func.func @transform_2(%arg0: i32, %arg1: i32) -> (i32, i32) {
    %c0_i32 = arith.constant 0 : i32
    %c0_i32_0 = arith.constant 0 : i32
    return %arg0, %c0_i32 : i32, i32
  }
  func.func @transform_3(%arg0: i32, %arg1: i32) -> (i32, i32, i32) {
    %c0_i32 = arith.constant 0 : i32
    %c0_i32_0 = arith.constant 0 : i32
    %c0_i32_1 = arith.constant 0 : i32
    return %arg0, %c0_i32, %c0_i32_0 : i32, i32, i32
  }
}

</mosaic_0001>

<llo_original>
// kernel: tpu_custom_call.1
$region0: #{tpu_custom_call.1}
  #allocation0 [shape = 'u32[]', space=smem, size = 0x4, offset = 0x4, fixed_abs, tag = 'smem constant byte address 0x4 - core index']
  #allocation1 [shape = 'u32[144,128]{1,0:T(1,128)}', space=vmem, size = 0x12000, scoped, tag = 'internal scratch']
  #allocation2 [shape = 'f32[128,128]{1,0:T(8,128)}', space=vmem, size = 0x10000, scoped, tag = 'scratch operand']
  %s0 = inlined_call_operand.hbm [shape: bf16[128,128], index: 0, kind: input, shape index: {}]
  %s1 = inlined_call_operand.hbm [shape: bf16[128,128], index: 1, kind: input, shape index: {}]
  %s2 = inlined_call_operand.hbm [shape: f32[128,128], index: 2, kind: output, shape index: {0}]
  %s3 = inlined_call_operand.hbm [shape: f32[1,2,128], index: 3, kind: output, shape index: {1}]
  %4 = xla_tuple %s2, %s3
  %s5 = sld [smem:[#allocation0]]
  $region42: #{tpu_custom_call.1} parent=0
    _
  %s7 = ssub.s32 1, %s5
  %s8 = scalar_select 0, %s7, %s5
  $region1: #{tpu_custom_call.1} parent=0
    #allocation3 [shape = 'u8[32768]{0}', space=vmem, size = 0x8000, scoped, tag = 'input window, operand 0, single buffered']
    #allocation4 [shape = 's32[1]{0}', space=sflag, size = 0x4, scoped, tag = 'scoped memory for tpu_custom_call.1']
    #allocation5 [shape = 's32[1]{0}', space=sflag, size = 0x4, scoped, tag = 'scoped memory for tpu_custom_call.1']
    #allocation6 [shape = 'u8[32768]{0}', space=vmem, size = 0x8000, scoped, tag = 'input window, operand 1, single buffered']
    #allocation7 [shape = 's32[1]{0}', space=sflag, size = 0x4, scoped, tag = 'scoped memory for tpu_custom_call.1']
    #allocation8 [shape = 'u8[65536]{0}', space=vmem, size = 0x10000, scoped, tag = 'output window, operand 0, single buffered']
    #allocation9 [shape = 'u8[1024]{0}', space=vmem, size = 0x400, scoped, tag = 'output window, operand 1, single buffered']
    #allocation10 [shape = 's32[1]{0}', space=sflag, size = 0x4, scoped, tag = 'scoped memory for tpu_custom_call.1']
    %9 = vsyncpa [#allocation4], 0
    %10 = vsyncpa [#allocation7], 0
    %11 = vsyncpa [#allocation5], 0
    %12 = vsyncpa [#allocation10], 0
    // Predicated region
    $region2: #{tpu_custom_call.1} parent=1 // pred_check
      _
    $region3: #{tpu_custom_call.1} parent=1 // pred_check_branch
      %14 = sbr.rel (0) target = $region5
    $region4: #{tpu_custom_call.1} parent=1 // pred_region
      %s16 = ssub.s32 1024, 1024
      %17 = vsyncadd [#allocation4], %s16
      %s18 = sshll.u32 [#allocation3], 4
      %s19 = int_to_ptr.vmem [resolvable:$true] %s18
      %24 = dma.hbm_to_vmem [thread:$0]  %s0, 1024, %s19, [#allocation4], 64, 64, 4
    $region5: #{tpu_custom_call.1} parent=1 // pred_fallthru
      _
    // Predicated region
    $region6: #{tpu_custom_call.1} parent=1 // pred_check
      _
    $region7: #{tpu_custom_call.1} parent=1 // pred_check_branch
      %26 = sbr.rel (0) target = $region9
    $region8: #{tpu_custom_call.1} parent=1 // pred_region
      %s28 = ssub.s32 1024, 1024
      %29 = vsyncadd [#allocation7], %s28
      %s30 = sshll.u32 [#allocation6], 4
      %s31 = int_to_ptr.vmem [resolvable:$true] %s30
      %36 = dma.hbm_to_vmem [thread:$0]  %s1, 1024, %s31, [#allocation7], 64, 64, 4
    $region9: #{tpu_custom_call.1} parent=1 // pred_fallthru
      _
    // Predicated region
    $region10: #{tpu_custom_call.1} parent=1 // pred_check
      _
    $region11: #{tpu_custom_call.1} parent=1 // pred_check_branch
      %38 = sbr.rel (0) target = $region13
    $region12: #{tpu_custom_call.1} parent=1 // pred_region
      %39 = dma.done [#allocation4], 1024
    $region13: #{tpu_custom_call.1} parent=1 // pred_fallthru
      _
    // Predicated region
    $region14: #{tpu_custom_call.1} parent=1 // pred_check
      _
    $region15: #{tpu_custom_call.1} parent=1 // pred_check_branch
      %41 = sbr.rel (0) target = $region17
    $region16: #{tpu_custom_call.1} parent=1 // pred_region
      %42 = dma.done [#allocation7], 1024
    $region17: #{tpu_custom_call.1} parent=1 // pred_fallthru
      _
    %p44 = scmp.eq.s32.totalorder 0, 0
    // Predicated region
    $region18: #{tpu_custom_call.1} parent=1 // pred_check
      %p45 = pneg %p44
    $region19: #{tpu_custom_call.1} parent=1 // pred_check_branch
      %47 = sbr.rel (%p45) target = $region21
    $region20: #{tpu_custom_call.1} parent=1 // pred_region
      %48 = vst [vmem:[#allocation2] sm:$0xff] 0.0
      %49 = vst [vmem:[#allocation2 + $0x8] sm:$0xff] 0.0
      %50 = vst [vmem:[#allocation2 + $0x10] sm:$0xff] 0.0
      %51 = vst [vmem:[#allocation2 + $0x18] sm:$0xff] 0.0
      %52 = vst [vmem:[#allocation2 + $0x20] sm:$0xff] 0.0
      %53 = vst [vmem:[#allocation2 + $0x28] sm:$0xff] 0.0
      %54 = vst [vmem:[#allocation2 + $0x30] sm:$0xff] 0.0
      %55 = vst [vmem:[#allocation2 + $0x38] sm:$0xff] 0.0
      %56 = vst [vmem:[#allocation2 + $0x40] sm:$0xff] 0.0
      %57 = vst [vmem:[#allocation2 + $0x48] sm:$0xff] 0.0
      %58 = vst [vmem:[#allocation2 + $0x50] sm:$0xff] 0.0
      %59 = vst [vmem:[#allocation2 + $0x58] sm:$0xff] 0.0
      %60 = vst [vmem:[#allocation2 + $0x60] sm:$0xff] 0.0
      %61 = vst [vmem:[#allocation2 + $0x68] sm:$0xff] 0.0
      %62 = vst [vmem:[#allocation2 + $0x70] sm:$0xff] 0.0
      %63 = vst [vmem:[#allocation2 + $0x78] sm:$0xff] 0.0
    $region21: #{tpu_custom_call.1} parent=1 // pred_fallthru
      _
    %v64 = vld [vmem:[#allocation2] sm:$0xff]
    %v65 = vld [vmem:[#allocation2 + $0x8] sm:$0xff]
    %v66 = vld [vmem:[#allocation2 + $0x10] sm:$0xff]
    %v67 = vld [vmem:[#allocation2 + $0x18] sm:$0xff]
    %v68 = vld [vmem:[#allocation2 + $0x20] sm:$0xff]
    %v69 = vld [vmem:[#allocation2 + $0x28] sm:$0xff]
    %v70 = vld [vmem:[#allocation2 + $0x30] sm:$0xff]
    %v71 = vld [vmem:[#allocation2 + $0x38] sm:$0xff]
    %v72 = vld [vmem:[#allocation2 + $0x40] sm:$0xff]
    %v73 = vld [vmem:[#allocation2 + $0x48] sm:$0xff]
    %v74 = vld [vmem:[#allocation2 + $0x50] sm:$0xff]
    %v75 = vld [vmem:[#allocation2 + $0x58] sm:$0xff]
    %v76 = vld [vmem:[#allocation2 + $0x60] sm:$0xff]
    %v77 = vld [vmem:[#allocation2 + $0x68] sm:$0xff]
    %v78 = vld [vmem:[#allocation2 + $0x70] sm:$0xff]
    %v79 = vld [vmem:[#allocation2 + $0x78] sm:$0xff]
    %v80 = vld [vmem:[#allocation3] sm:$0xf]
    %v81 = vld [vmem:[#allocation3 + $0x4] sm:$0xf]
    %v82 = vld [vmem:[#allocation3 + $0x8] sm:$0xf]
    %v83 = vld [vmem:[#allocation3 + $0xc] sm:$0xf]
    %v84 = vld [vmem:[#allocation3 + $0x10] sm:$0xf]
    %v85 = vld [vmem:[#allocation3 + $0x14] sm:$0xf]
    %v86 = vld [vmem:[#allocation3 + $0x18] sm:$0xf]
    %v87 = vld [vmem:[#allocation3 + $0x1c] sm:$0xf]
    %v88 = vld [vmem:[#allocation3 + $0x20] sm:$0xf]
    %v89 = vld [vmem:[#allocation3 + $0x24] sm:$0xf]
    %v90 = vld [vmem:[#allocation3 + $0x28] sm:$0xf]
    %v91 = vld [vmem:[#allocation3 + $0x2c] sm:$0xf]
    %v92 = vld [vmem:[#allocation3 + $0x30] sm:$0xf]
    %v93 = vld [vmem:[#allocation3 + $0x34] sm:$0xf]
    %v94 = vld [vmem:[#allocation3 + $0x38] sm:$0xf]
    %v95 = vld [vmem:[#allocation3 + $0x3c] sm:$0xf]
    %v96 = vld [vmem:[#allocation6] sm:$0xf]
    %v97 = vld [vmem:[#allocation6 + $0x4] sm:$0xf]
    %v98 = vld [vmem:[#allocation6 + $0x8] sm:$0xf]
    %v99 = vld [vmem:[#allocation6 + $0xc] sm:$0xf]
    %v100 = vld [vmem:[#allocation6 + $0x10] sm:$0xf]
    %v101 = vld [vmem:[#allocation6 + $0x14] sm:$0xf]
    %v102 = vld [vmem:[#allocation6 + $0x18] sm:$0xf]
    %v103 = vld [vmem:[#allocation6 + $0x1c] sm:$0xf]
    %v104 = vld [vmem:[#allocation6 + $0x20] sm:$0xf]
    %v105 = vld [vmem:[#allocation6 + $0x24] sm:$0xf]
    %v106 = vld [vmem:[#allocation6 + $0x28] sm:$0xf]
    %v107 = vld [vmem:[#allocation6 + $0x2c] sm:$0xf]
    %v108 = vld [vmem:[#allocation6 + $0x30] sm:$0xf]
    %v109 = vld [vmem:[#allocation6 + $0x34] sm:$0xf]
    %v110 = vld [vmem:[#allocation6 + $0x38] sm:$0xf]
    %v111 = vld [vmem:[#allocation6 + $0x3c] sm:$0xf]
    %v128 = vunpack.c.l.b16 %v80
    %v129 = vunpack.c.l.b16 %v81
    %v130 = vunpack.c.l.b16 %v82
    %v131 = vunpack.c.l.b16 %v83
    %v132 = vunpack.c.l.b16 %v84
    %v133 = vunpack.c.l.b16 %v85
    %v134 = vunpack.c.l.b16 %v86
    %v135 = vunpack.c.l.b16 %v87
    %v136 = vunpack.c.l.b16 %v88
    %v137 = vunpack.c.l.b16 %v89
    %v138 = vunpack.c.l.b16 %v90
    %v139 = vunpack.c.l.b16 %v91
    %v140 = vunpack.c.l.b16 %v92
    %v141 = vunpack.c.l.b16 %v93
    %v142 = vunpack.c.l.b16 %v94
    %v143 = vunpack.c.l.b16 %v95
    %v144 = vpack.c.b16 %v129, %v128
    %v145 = vpack.c.b16 %v131, %v130
    %v146 = vpack.c.b16 %v133, %v132
    %v147 = vpack.c.b16 %v135, %v134
    %v148 = vpack.c.b16 %v137, %v136
    %v149 = vpack.c.b16 %v139, %v138
    %v150 = vpack.c.b16 %v141, %v140
    %v151 = vpack.c.b16 %v143, %v142
    %v176 = vunpack.c.l.b16 %v96
    %v177 = vunpack.c.l.b16 %v97
    %v178 = vunpack.c.l.b16 %v98
    %v179 = vunpack.c.l.b16 %v99
    %v180 = vunpack.c.l.b16 %v100
    %v181 = vunpack.c.l.b16 %v101
    %v182 = vunpack.c.l.b16 %v102
    %v183 = vunpack.c.l.b16 %v103
    %v184 = vunpack.c.l.b16 %v104
    %v185 = vunpack.c.l.b16 %v105
    %v186 = vunpack.c.l.b16 %v106
    %v187 = vunpack.c.l.b16 %v107
    %v188 = vunpack.c.l.b16 %v108
    %v189 = vunpack.c.l.b16 %v109
    %v190 = vunpack.c.l.b16 %v110
    %v191 = vunpack.c.l.b16 %v111
    %v192 = vpack.c.b16 %v177, %v176
    %v193 = vpack.c.b16 %v179, %v178
    %v194 = vpack.c.b16 %v181, %v180
    %v195 = vpack.c.b16 %v183, %v182
    %v196 = vpack.c.b16 %v185, %v184
    %v197 = vpack.c.b16 %v187, %v186
    %v198 = vpack.c.b16 %v189, %v188
    %v199 = vpack.c.b16 %v191, %v190
    %208 = vmatprep.subr.bf16.mxu0 0
    %209 = vmatpush1.bf16.msra.mxu0 %v192
    %210 = vmatprep.subr.bf16.mxu0 0
    %211 = vmatpush1.bf16.msra.mxu0 %v193
    %212 = vmatprep.subr.bf16.mxu0 0
    %213 = vmatpush1.bf16.msra.mxu0 %v194
    %214 = vmatprep.subr.bf16.mxu0 0
    %215 = vmatpush1.bf16.msra.mxu0 %v195
    %216 = vmatprep.subr.bf16.mxu0 0
    %217 = vmatpush1.bf16.msra.mxu0 %v196
    %218 = vmatprep.subr.bf16.mxu0 0
    %219 = vmatpush1.bf16.msra.mxu0 %v197
    %220 = vmatprep.subr.bf16.mxu0 0
    %221 = vmatpush1.bf16.msra.mxu0 %v198
    %222 = vmatprep.subr.bf16.mxu0 0
    %223 = vmatpush1.bf16.msra.mxu0 %v199
    %224 = vmatprep.subr.bf16.mxu0 0
    %225 = vmatpush1.bf16.msra.mxu0 0
    %226 = vmatprep.subr.bf16.mxu0 0
    %227 = vmatpush1.bf16.msra.mxu0 0
    %228 = vmatprep.subr.bf16.mxu0 0
    %229 = vmatpush1.bf16.msra.mxu0 0
    %230 = vmatprep.subr.bf16.mxu0 0
    %231 = vmatpush1.bf16.msra.mxu0 0
    %232 = vmatprep.subr.bf16.mxu0 0
    %233 = vmatpush1.bf16.msra.mxu0 0
    %234 = vmatprep.subr.bf16.mxu0 0
    %235 = vmatpush1.bf16.msra.mxu0 0
    %236 = vmatprep.subr.bf16.mxu0 0
    %237 = vmatpush1.bf16.msra.mxu0 0
    %238 = vmatprep.subr.bf16.mxu0 0
    %239 = vmatpush1.bf16.msra.mxu0 0
    %240 = vmatprep.mubr.bf16.mxu0 0
    %241 = vmatmul.mubr.bf16.gmra.mrb[0].mxu0 %v144
    %v242 = vpop.f32.mrb[0].mxu0
    %v243 = vadd.f32 0.0, %v242
    %v244 = vpop.f32.mrb[0].mxu0
    %v245 = vpop.f32.mrb[0].mxu0
    %v246 = vadd.f32 0.0, %v245
    %v247 = vpop.f32.mrb[0].mxu0
    %248 = vmatprep.mubr.bf16.mxu0 0
    %249 = vmatmul.mubr.bf16.gmra.mrb[0].mxu0 %v145
    %v250 = vpop.f32.mrb[0].mxu0
    %v251 = vadd.f32 0.0, %v250
    %v252 = vpop.f32.mrb[0].mxu0
    %v253 = vpop.f32.mrb[0].mxu0
    %v254 = vadd.f32 0.0, %v253
    %v255 = vpop.f32.mrb[0].mxu0
    %256 = vmatprep.mubr.bf16.mxu0 0
    %257 = vmatmul.mubr.bf16.gmra.mrb[0].mxu0 %v146
    %v258 = vpop.f32.mrb[0].mxu0
    %v259 = vadd.f32 0.0, %v258
    %v260 = vpop.f32.mrb[0].mxu0
    %v261 = vpop.f32.mrb[0].mxu0
    %v262 = vadd.f32 0.0, %v261
    %v263 = vpop.f32.mrb[0].mxu0
    %264 = vmatprep.mubr.bf16.mxu0 0
    %265 = vmatmul.mubr.bf16.gmra.mrb[0].mxu0 %v147
    %v266 = vpop.f32.mrb[0].mxu0
    %v267 = vadd.f32 0.0, %v266
    %v268 = vpop.f32.mrb[0].mxu0
    %v269 = vpop.f32.mrb[0].mxu0
    %v270 = vadd.f32 0.0, %v269
    %v271 = vpop.f32.mrb[0].mxu0
    %272 = vmatprep.mubr.bf16.mxu0 0
    %273 = vmatmul.mubr.bf16.gmra.mrb[0].mxu0 %v148
    %v274 = vpop.f32.mrb[0].mxu0
    %v275 = vadd.f32 0.0, %v274
    %v276 = vpop.f32.mrb[0].mxu0
    %v277 = vpop.f32.mrb[0].mxu0
    %v278 = vadd.f32 0.0, %v277
    %v279 = vpop.f32.mrb[0].mxu0
    %280 = vmatprep.mubr.bf16.mxu0 0
    %281 = vmatmul.mubr.bf16.gmra.mrb[0].mxu0 %v149
    %v282 = vpop.f32.mrb[0].mxu0
    %v283 = vadd.f32 0.0, %v282
    %v284 = vpop.f32.mrb[0].mxu0
    %v285 = vpop.f32.mrb[0].mxu0
    %v286 = vadd.f32 0.0, %v285
    %v287 = vpop.f32.mrb[0].mxu0
    %288 = vmatprep.mubr.bf16.mxu0 0
    %289 = vmatmul.mubr.bf16.gmra.mrb[0].mxu0 %v150
    %v290 = vpop.f32.mrb[0].mxu0
    %v291 = vadd.f32 0.0, %v290
    %v292 = vpop.f32.mrb[0].mxu0
    %v293 = vpop.f32.mrb[0].mxu0
    %v294 = vadd.f32 0.0, %v293
    %v295 = vpop.f32.mrb[0].mxu0
    %296 = vmatprep.mubr.bf16.mxu0 0
    %297 = vmatmul.mubr.bf16.gmra.mrb[0].mxu0 %v151
    %v298 = vpop.f32.mrb[0].mxu0
    %v299 = vadd.f32 0.0, %v298
    %v300 = vpop.f32.mrb[0].mxu0
    %v301 = vpop.f32.mrb[0].mxu0
    %v302 = vadd.f32 0.0, %v301
    %v303 = vpop.f32.mrb[0].mxu0
    %304 = vdwg.mxu0
    %v305 = vadd.f32 %v64, %v243
    %v306 = vadd.f32 %v65, %v246
    %v307 = vadd.f32 %v66, %v251
    %v308 = vadd.f32 %v67, %v254
    %v309 = vadd.f32 %v68, %v259
    %v310 = vadd.f32 %v69, %v262
    %v311 = vadd.f32 %v70, %v267
    %v312 = vadd.f32 %v71, %v270
    %v313 = vadd.f32 %v72, %v275
    %v314 = vadd.f32 %v73, %v278
    %v315 = vadd.f32 %v74, %v283
    %v316 = vadd.f32 %v75, %v286
    %v317 = vadd.f32 %v76, %v291
    %v318 = vadd.f32 %v77, %v294
    %v319 = vadd.f32 %v78, %v299
    %v320 = vadd.f32 %v79, %v302
    %321 = vst [vmem:[#allocation2] sm:$0xff] %v305
    %322 = vst [vmem:[#allocation2 + $0x8] sm:$0xff] %v306
    %323 = vst [vmem:[#allocation2 + $0x10] sm:$0xff] %v307
    %324 = vst [vmem:[#allocation2 + $0x18] sm:$0xff] %v308
    %325 = vst [vmem:[#allocation2 + $0x20] sm:$0xff] %v309
    %326 = vst [vmem:[#allocation2 + $0x28] sm:$0xff] %v310
    %327 = vst [vmem:[#allocation2 + $0x30] sm:$0xff] %v311
    %328 = vst [vmem:[#allocation2 + $0x38] sm:$0xff] %v312
    %329 = vst [vmem:[#allocation2 + $0x40] sm:$0xff] %v313
    %330 = vst [vmem:[#allocation2 + $0x48] sm:$0xff] %v314
    %331 = vst [vmem:[#allocation2 + $0x50] sm:$0xff] %v315
    %332 = vst [vmem:[#allocation2 + $0x58] sm:$0xff] %v316
    %333 = vst [vmem:[#allocation2 + $0x60] sm:$0xff] %v317
    %334 = vst [vmem:[#allocation2 + $0x68] sm:$0xff] %v318
    %335 = vst [vmem:[#allocation2 + $0x70] sm:$0xff] %v319
    %336 = vst [vmem:[#allocation2 + $0x78] sm:$0xff] %v320
    // Predicated region
    $region22: #{tpu_custom_call.1} parent=1 // pred_check
      %p337 = pneg %p44
    $region23: #{tpu_custom_call.1} parent=1 // pred_check_branch
      %339 = sbr.rel (%p337) target = $region25
    $region24: #{tpu_custom_call.1} parent=1 // pred_region
      %v340 = vld [vmem:[#allocation2] sm:$0xff]
      %v341 = vld [vmem:[#allocation2 + $0x8] sm:$0xff]
      %v342 = vld [vmem:[#allocation2 + $0x10] sm:$0xff]
      %v343 = vld [vmem:[#allocation2 + $0x18] sm:$0xff]
      %v344 = vld [vmem:[#allocation2 + $0x20] sm:$0xff]
      %v345 = vld [vmem:[#allocation2 + $0x28] sm:$0xff]
      %v346 = vld [vmem:[#allocation2 + $0x30] sm:$0xff]
      %v347 = vld [vmem:[#allocation2 + $0x38] sm:$0xff]
      %v348 = vld [vmem:[#allocation2 + $0x40] sm:$0xff]
      %v349 = vld [vmem:[#allocation2 + $0x48] sm:$0xff]
      %v350 = vld [vmem:[#allocation2 + $0x50] sm:$0xff]
      %v351 = vld [vmem:[#allocation2 + $0x58] sm:$0xff]
      %v352 = vld [vmem:[#allocation2 + $0x60] sm:$0xff]
      %v353 = vld [vmem:[#allocation2 + $0x68] sm:$0xff]
      %v354 = vld [vmem:[#allocation2 + $0x70] sm:$0xff]
      %v355 = vld [vmem:[#allocation2 + $0x78] sm:$0xff]
      %356 = vst [vmem:[#allocation8] sm:$0xff] %v340
      %357 = vst [vmem:[#allocation8 + $0x8] sm:$0xff] %v341
      %358 = vst [vmem:[#allocation8 + $0x10] sm:$0xff] %v342
      %359 = vst [vmem:[#allocation8 + $0x18] sm:$0xff] %v343
      %360 = vst [vmem:[#allocation8 + $0x20] sm:$0xff] %v344
      %361 = vst [vmem:[#allocation8 + $0x28] sm:$0xff] %v345
      %362 = vst [vmem:[#allocation8 + $0x30] sm:$0xff] %v346
      %363 = vst [vmem:[#allocation8 + $0x38] sm:$0xff] %v347
      %364 = vst [vmem:[#allocation8 + $0x40] sm:$0xff] %v348
      %365 = vst [vmem:[#allocation8 + $0x48] sm:$0xff] %v349
      %366 = vst [vmem:[#allocation8 + $0x50] sm:$0xff] %v350
      %367 = vst [vmem:[#allocation8 + $0x58] sm:$0xff] %v351
      %368 = vst [vmem:[#allocation8 + $0x60] sm:$0xff] %v352
      %369 = vst [vmem:[#allocation8 + $0x68] sm:$0xff] %v353
      %370 = vst [vmem:[#allocation8 + $0x70] sm:$0xff] %v354
      %371 = vst [vmem:[#allocation8 + $0x78] sm:$0xff] %v355
      %v372 = vadd.f32 %v340, %v341
      %v373 = vadd.f32 %v372, %v342
      %v374 = vadd.f32 %v373, %v343
      %v375 = vadd.f32 %v374, %v344
      %v376 = vadd.f32 %v375, %v345
      %v377 = vadd.f32 %v376, %v346
      %v378 = vadd.f32 %v377, %v347
      %v379 = vadd.f32 %v378, %v348
      %v380 = vadd.f32 %v379, %v349
      %v381 = vadd.f32 %v380, %v350
      %v382 = vadd.f32 %v381, %v351
      %v383 = vadd.f32 %v382, %v352
      %v384 = vadd.f32 %v383, %v353
      %v385 = vadd.f32 %v384, %v354
      %v386 = vadd.f32 %v385, %v355
      %v387 = vrot.slane %v386, 4
      %v388 = vadd.f32 %v386, %v387
      %v389 = vrot.slane %v388, 2
      %v390 = vadd.f32 %v388, %v389
      %v391 = vrot.slane %v390, 1
      %v392 = vadd.f32 %v390, %v391
      %v393 = vmul.f32 %v340, %v340
      %v394 = vmul.f32 %v341, %v341
      %v395 = vmul.f32 %v342, %v342
      %v396 = vmul.f32 %v343, %v343
      %v397 = vmul.f32 %v344, %v344
      %v398 = vmul.f32 %v345, %v345
      %v399 = vmul.f32 %v346, %v346
      %v400 = vmul.f32 %v347, %v347
      %v401 = vmul.f32 %v348, %v348
      %v402 = vmul.f32 %v349, %v349
      %v403 = vmul.f32 %v350, %v350
      %v404 = vmul.f32 %v351, %v351
      %v405 = vmul.f32 %v352, %v352
      %v406 = vmul.f32 %v353, %v353
      %v407 = vmul.f32 %v354, %v354
      %v408 = vmul.f32 %v355, %v355
      %v409 = vadd.f32 %v393, %v394
      %v410 = vadd.f32 %v409, %v395
      %v411 = vadd.f32 %v410, %v396
      %v412 = vadd.f32 %v411, %v397
      %v413 = vadd.f32 %v412, %v398
      %v414 = vadd.f32 %v413, %v399
      %v415 = vadd.f32 %v414, %v400
      %v416 = vadd.f32 %v415, %v401
      %v417 = vadd.f32 %v416, %v402
      %v418 = vadd.f32 %v417, %v403
      %v419 = vadd.f32 %v418, %v404
      %v420 = vadd.f32 %v419, %v405
      %v421 = vadd.f32 %v420, %v406
      %v422 = vadd.f32 %v421, %v407
      %v423 = vadd.f32 %v422, %v408
      %v424 = vrot.slane %v423, 4
      %v425 = vadd.f32 %v423, %v424
      %v426 = vrot.slane %v425, 2
      %v427 = vadd.f32 %v425, %v426
      %v428 = vrot.slane %v427, 1
      %v429 = vadd.f32 %v427, %v428
      %vm430 = vcmask 1040384
      %v431 = vsel %vm430, %v392, %v429
      %432 = vst [vmem:[#allocation9] sm:$0x3] %v431
    $region25: #{tpu_custom_call.1} parent=1 // pred_fallthru
      _
    // Predicated region
    $region26: #{tpu_custom_call.1} parent=1 // pred_check
      _
    $region27: #{tpu_custom_call.1} parent=1 // pred_check_branch
      %434 = sbr.rel (0) target = $region29
    $region28: #{tpu_custom_call.1} parent=1 // pred_region
      %s436 = ssub.s32 2048, 2048
      %437 = vsyncadd [#allocation5], %s436
      %s438 = sshll.u32 [#allocation8], 4
      %s439 = int_to_ptr.vmem [resolvable:$true] %s438
      %444 = dma.vmem_to_hbm [thread:$0]  %s439, 2048, %s2, [#allocation5], 128, 128, 8
    $region29: #{tpu_custom_call.1} parent=1 // pred_fallthru
      _
    // Predicated region
    $region30: #{tpu_custom_call.1} parent=1 // pred_check
      _
    $region31: #{tpu_custom_call.1} parent=1 // pred_check_branch
      %446 = sbr.rel (0) target = $region33
    $region32: #{tpu_custom_call.1} parent=1 // pred_region
      %s448 = ssub.s32 32, 32
      %449 = vsyncadd [#allocation10], %s448
      %s451 = sshll.u32 [#allocation9], 4
      %s452 = int_to_ptr.vmem [resolvable:$true] %s451
      %454 = dma.vmem_to_hbm [thread:$0]  %s452, 32, %s3, [#allocation10]
    $region33: #{tpu_custom_call.1} parent=1 // pred_fallthru
      _
    // Predicated region
    $region34: #{tpu_custom_call.1} parent=1 // pred_check
      _
    $region35: #{tpu_custom_call.1} parent=1 // pred_check_branch
      %456 = sbr.rel (0) target = $region37
    $region36: #{tpu_custom_call.1} parent=1 // pred_region
      %457 = dma.done [#allocation5], 2048
    $region37: #{tpu_custom_call.1} parent=1 // pred_fallthru
      _
    // Predicated region
    $region38: #{tpu_custom_call.1} parent=1 // pred_check
      _
    $region39: #{tpu_custom_call.1} parent=1 // pred_check_branch
      %459 = sbr.rel (0) target = $region41
    $region40: #{tpu_custom_call.1} parent=1 // pred_region
      %460 = dma.done [#allocation10], 32
    $region41: #{tpu_custom_call.1} parent=1 // pred_fallthru
      _
    %461 = vsyncpa [#allocation4], 1
    %462 = vsyncpa [#allocation7], 1
    %463 = vsyncpa [#allocation5], 1
    %464 = vsyncpa [#allocation10], 1

</llo_original>
